<compile_context>
chip_gen: v7x
topology: tpu7x:2x2x1
jax: 0.10.0
libtpu: 0.0.40
codegen_flags: <defaults>
</compile_context>

<pallas_src>
import jax
import jax.numpy as jnp
from jax.experimental import pallas as pl
from jax.experimental.pallas import tpu as pltpu

EPS = 1e-5
LANES = 128
IN_F, HID, OUT_F = 5, 10, 5

# Packed f32 [392, 128] parameter slab (lanes = output features), every matmul
# operand a full tile-aligned (128, 128) block:
#   rows   0:128  W1 (5 x 10)  zero-padded          (rows 0:5,  cols 0:10 used)
#   rows 128:256  W2 (10 x 10) zero-padded          (rows 0:10, cols 0:10 used)
#   rows 256:384  W3 (10 x 5)  zero-padded          (rows 0:10, cols 0:5  used)
#   row  384      gamma1 (cols 0:10)
#   row  385      beta1  (cols 0:10)
#   row  386      gamma2 (cols 0:10)
#   row  387      beta2  (cols 0:10)
#   row  388      b3     (cols 0:5)
#   rows 389:392  pad (completes the last (8,128) tile)
W1_R0, W2_R0, W3_R0, PR_R0 = 0, 128, 256, 384
SLAB_ROWS = 392


def _bn_tanh(h, gamma, beta):
    """Training-mode BatchNorm1d (batch stats, biased var) fused with tanh.

    Padded lanes (gamma == 0, h == 0) stay exactly 0: scale=0, shift=0, tanh(0)=0.
    """
    mean = jnp.mean(h, axis=0, keepdims=True)                 # (1, 128) XLU reduce
    hc = h - mean
    var = jnp.mean(hc * hc, axis=0, keepdims=True)            # biased variance
    scale = jax.lax.rsqrt(var + EPS) * gamma                  # (1, 128), EUP rsqrt
    shift = beta - mean * scale                               # (1, 128)
    return jnp.tanh(h * scale + shift)                        # 2 broadcast VALU ops


def _mlp_kernel(x_ref, p_ref, o_ref, xbuf_ref):
    # Zero-extend the (B,5) input to a clean, explicitly-zeroed (B,128) block so
    # every matmul contracts over a full K=128 with well-defined zeros (VMEM only).
    xbuf_ref[...] = jnp.zeros_like(xbuf_ref)
    xbuf_ref[:, 0:IN_F] = x_ref[...]

    # ---- linear1 (bias cancelled by the following training-mode BN) ----
    h = jnp.dot(xbuf_ref[...], p_ref[W1_R0:W1_R0 + LANES, :],
                preferred_element_type=jnp.float32)
    h = _bn_tanh(h, p_ref[PR_R0 + 0:PR_R0 + 1, :], p_ref[PR_R0 + 1:PR_R0 + 2, :])

    # ---- linear2 (bias cancelled by the following training-mode BN) ----
    h = jnp.dot(h, p_ref[W2_R0:W2_R0 + LANES, :], preferred_element_type=jnp.float32)
    h = _bn_tanh(h, p_ref[PR_R0 + 2:PR_R0 + 3, :], p_ref[PR_R0 + 3:PR_R0 + 4, :])

    # ---- linear3 + b3 ; emit only the 5 real output features ----
    y = jnp.dot(h, p_ref[W3_R0:W3_R0 + LANES, :], preferred_element_type=jnp.float32)
    y = y + p_ref[PR_R0 + 4:PR_R0 + 5, :]
    o_ref[...] = y[:, 0:OUT_F]


def pack_params(p):
    """Pack all parameters into a single tile-aligned [392,128] f32 slab."""
    slab = jnp.zeros((SLAB_ROWS, LANES), jnp.float32)
    slab = slab.at[W1_R0:W1_R0 + IN_F, 0:HID].set(p["w1"])
    slab = slab.at[W2_R0:W2_R0 + HID, 0:HID].set(p["w2"])
    slab = slab.at[W3_R0:W3_R0 + HID, 0:OUT_F].set(p["w3"])
    slab = slab.at[PR_R0 + 0, 0:HID].set(p["g1"].reshape(HID))
    slab = slab.at[PR_R0 + 1, 0:HID].set(p["be1"].reshape(HID))
    slab = slab.at[PR_R0 + 2, 0:HID].set(p["g2"].reshape(HID))
    slab = slab.at[PR_R0 + 3, 0:HID].set(p["be2"].reshape(HID))
    slab = slab.at[PR_R0 + 4, 0:OUT_F].set(p["b3"].reshape(OUT_F))
    # NOTE: b1/b2 deliberately omitted (cancelled by training-mode BatchNorm).
    return slab


@jax.jit
def multi_class_model_forward(x, slab):
    """x: [B, 5] (any real dtype; cast like torch's x.float()). slab: packed params."""
    B = x.shape[0]
    if B < 2:
        # PyTorch raises for BatchNorm1d training with batch size 1.
        raise ValueError("training-mode BatchNorm1d needs batch size >= 2")
    # Single-block design: whole batch + slab resident in VMEM.
    # TODO(synk): for B beyond ~8K rows (v7x: ~4K per TensorCore) switch to a batch
    # grid with a two-pass BatchNorm (whole-batch stats) and 'parallel' megacore.
    if B > 8192:
        raise NotImplementedError("single-block kernel: batch too large for VMEM")

    x32 = x.astype(jnp.float32)

    b_pad = ((B + 7) // 8) * 8
    vmem_limit = min(
        96 * 1024 * 1024,
        4 * 1024 * 1024                        # Mosaic internal scratch / margin
        + 10 * b_pad * LANES * 4               # x, xbuf, out, spilled intermediates
        + 2 * SLAB_ROWS * LANES * 4,           # parameter slab
    )

    flops = 2 * B * (IN_F * HID + HID * HID + HID * OUT_F) + 12 * B * LANES
    transcendentals = 2 * B * LANES + 2 * LANES            # tanh + rsqrt
    bytes_accessed = 4 * (B * IN_F + SLAB_ROWS * LANES + B * OUT_F)

    vmem = pl.BlockSpec(memory_space=pltpu.MemorySpace.VMEM)
    return pl.pallas_call(
        _mlp_kernel,
        out_shape=jax.ShapeDtypeStruct((B, OUT_F), jnp.float32),
        in_specs=[vmem, vmem],
        out_specs=vmem,
        scratch_shapes=[pltpu.VMEM((B, LANES), jnp.float32)],
        compiler_params=pltpu.CompilerParams(vmem_limit_bytes=vmem_limit),
        cost_estimate=pl.CostEstimate(flops=flops,
                                      transcendentals=transcendentals,
                                      bytes_accessed=bytes_accessed),
    )(x32, slab)


def init_params(key):
    """PyTorch-style init: Linear U(-1/sqrt(fan_in), +), BN weight=1, bias=0."""
    ks = jax.random.split(key, 6)

    def linear(kw, kb, fan_in, fan_out):
        bound = 1.0 / jnp.sqrt(fan_in)
        w = jax.random.uniform(kw, (fan_in, fan_out), jnp.float32, -bound, bound)
        b = jax.random.uniform(kb, (1, fan_out), jnp.float32, -bound, bound)
        return w, b

    w1, b1 = linear(ks[0], ks[1], IN_F, HID)
    w2, b2 = linear(ks[2], ks[3], HID, HID)
    w3, b3 = linear(ks[4], ks[5], HID, OUT_F)
    return dict(
        w1=w1, b1=b1, g1=jnp.ones((1, HID), jnp.float32), be1=jnp.zeros((1, HID), jnp.float32),
        w2=w2, b2=b2, g2=jnp.ones((1, HID), jnp.float32), be2=jnp.zeros((1, HID), jnp.float32),
        w3=w3, b3=b3,
    )


def reference_forward(x, p):
    """Pure-JAX reference mirroring the PyTorch forward (training-mode BN,
    biases b1/b2 included — they must cancel against the BN mean)."""
    def bn(h, g, be):
        m = jnp.mean(h, axis=0, keepdims=True)
        v = jnp.mean((h - m) ** 2, axis=0, keepdims=True)
        return (h - m) / jnp.sqrt(v + EPS) * g + be

    h = x.astype(jnp.float32) @ p["w1"] + p["b1"]
    h = jnp.tanh(bn(h, p["g1"], p["be1"]))
    h = h @ p["w2"] + p["b2"]
    h = jnp.tanh(bn(h, p["g2"], p["be2"]))
    return h @ p["w3"] + p["b3"]


if __name__ == "__main__":
    key = jax.random.PRNGKey(0)
    kx, kp = jax.random.split(key)

    B = 8                                  # small batch; 5 input features as in the module
    x = jax.random.normal(kx, (B, IN_F), jnp.float32)
    params = init_params(kp)
    slab = pack_params(params)

    out = multi_class_model_forward(x, slab)
    out = jax.block_until_ready(out)

    ref = reference_forward(x, params)
    assert out.shape == (B, OUT_F)
    assert jnp.allclose(out, ref, atol=3e-5, rtol=1e-4), (
        float(jnp.max(jnp.abs(out - ref))))

    print("KERNEL_OK")
</pallas_src>

<mosaic_0001>
module attributes {stable_mosaic.version = 11 : i64} {
  func.func @_mlp_kernel(%arg0: memref<8x5xf32, #tpu.memory_space<vmem>>, %arg1: memref<392x128xf32, #tpu.memory_space<vmem>>, %arg2: memref<8x5xf32, #tpu.memory_space<vmem>>, %arg3: memref<8x128xf32, #tpu.memory_space<vmem>>) attributes {dimension_semantics = [], scalar_prefetch = 0 : i64, scratch_operands = 1 : i64, tpu.core_type = #tpu.core_type<tc>} {
    %cst = arith.constant 0.000000e+00 : f32
    %0 = vector.broadcast %cst : f32 to vector<8x128xf32>
    %c0 = arith.constant 0 : index
    %c0_0 = arith.constant 0 : index
    %1 = vector.load %arg3[%c0, %c0_0] : memref<8x128xf32, #tpu.memory_space<vmem>>, vector<8x128xf32>
    tpu.vector_store %arg3[%c0, %c0_0], %0 {strides = array<i32>} : memref<8x128xf32, #tpu.memory_space<vmem>>, vector<8x128xf32>,
    %c0_1 = arith.constant 0 : index
    %c0_2 = arith.constant 0 : index
    %2 = vector.load %arg0[%c0_1, %c0_2] : memref<8x5xf32, #tpu.memory_space<vmem>>, vector<8x5xf32>
    %c0_3 = arith.constant 0 : index
    %c0_4 = arith.constant 0 : index
    %3 = vector.load %arg3[%c0_3, %c0_4] : memref<8x128xf32, #tpu.memory_space<vmem>>, vector<8x5xf32>
    tpu.vector_store %arg3[%c0_3, %c0_4], %2 {strides = array<i32>} : memref<8x128xf32, #tpu.memory_space<vmem>>, vector<8x5xf32>,
    %c0_5 = arith.constant 0 : index
    %c0_6 = arith.constant 0 : index
    %4 = vector.load %arg3[%c0_5, %c0_6] : memref<8x128xf32, #tpu.memory_space<vmem>>, vector<8x128xf32>
    %c0_7 = arith.constant 0 : index
    %c0_8 = arith.constant 0 : index
    %5 = vector.load %arg1[%c0_7, %c0_8] : memref<392x128xf32, #tpu.memory_space<vmem>>, vector<128x128xf32>
    %cst_9 = arith.constant dense<0.000000e+00> : vector<8x128xf32>
    %6 = tpu.matmul %4, %5, %cst_9 {dimension_numbers = #tpu.dot_dimension_numbers<[1], [0], [0], [1], [0, 0, 1, 1], [], []>} : vector<8x128xf32>, vector<128x128xf32>, vector<8x128xf32> -> vector<8x128xf32>
    %c384 = arith.constant 384 : index
    %c0_10 = arith.constant 0 : index
    %7 = vector.load %arg1[%c384, %c0_10] : memref<392x128xf32, #tpu.memory_space<vmem>>, vector<1x128xf32>
    %c385 = arith.constant 385 : index
    %c0_11 = arith.constant 0 : index
    %8 = vector.load %arg1[%c385, %c0_11] : memref<392x128xf32, #tpu.memory_space<vmem>>, vector<1x128xf32>
    %cst_12 = arith.constant dense<0.000000e+00> : vector<128xf32>
    %9 = vector.multi_reduction <add>, %6, %cst_12 [0] : vector<8x128xf32> to vector<128xf32>
    %10 = vector.shape_cast %9 : vector<128xf32> to vector<1x128xf32>
    %cst_13 = arith.constant 8.000000e+00 : f32
    %11 = vector.broadcast %cst_13 : f32 to vector<1x128xf32>
    %12 = arith.divf %10, %11 : vector<1x128xf32>
    %13 = vector.broadcast %12 : vector<1x128xf32> to vector<8x128xf32>
    %14 = arith.subf %6, %13 : vector<8x128xf32>
    %15 = arith.mulf %14, %14 : vector<8x128xf32>
    %cst_14 = arith.constant dense<0.000000e+00> : vector<128xf32>
    %16 = vector.multi_reduction <add>, %15, %cst_14 [0] : vector<8x128xf32> to vector<128xf32>
    %17 = vector.shape_cast %16 : vector<128xf32> to vector<1x128xf32>
    %cst_15 = arith.constant 8.000000e+00 : f32
    %18 = vector.broadcast %cst_15 : f32 to vector<1x128xf32>
    %19 = arith.divf %17, %18 : vector<1x128xf32>
    %cst_16 = arith.constant 9.99999974E-6 : f32
    %20 = vector.broadcast %cst_16 : f32 to vector<1x128xf32>
    %21 = arith.addf %19, %20 : vector<1x128xf32>
    %22 = math.rsqrt %21 : vector<1x128xf32>
    %23 = arith.mulf %22, %7 : vector<1x128xf32>
    %24 = arith.mulf %12, %23 : vector<1x128xf32>
    %25 = arith.subf %8, %24 : vector<1x128xf32>
    %26 = vector.broadcast %23 : vector<1x128xf32> to vector<8x128xf32>
    %27 = arith.mulf %6, %26 : vector<8x128xf32>
    %28 = vector.broadcast %25 : vector<1x128xf32> to vector<8x128xf32>
    %29 = arith.addf %27, %28 : vector<8x128xf32>
    %30 = math.tanh %29 : vector<8x128xf32>
    %c128 = arith.constant 128 : index
    %c0_17 = arith.constant 0 : index
    %31 = vector.load %arg1[%c128, %c0_17] : memref<392x128xf32, #tpu.memory_space<vmem>>, vector<128x128xf32>
    %cst_18 = arith.constant dense<0.000000e+00> : vector<8x128xf32>
    %32 = tpu.matmul %30, %31, %cst_18 {dimension_numbers = #tpu.dot_dimension_numbers<[1], [0], [0], [1], [0, 0, 1, 1], [], []>} : vector<8x128xf32>, vector<128x128xf32>, vector<8x128xf32> -> vector<8x128xf32>
    %c386 = arith.constant 386 : index
    %c0_19 = arith.constant 0 : index
    %33 = vector.load %arg1[%c386, %c0_19] : memref<392x128xf32, #tpu.memory_space<vmem>>, vector<1x128xf32>
    %c387 = arith.constant 387 : index
    %c0_20 = arith.constant 0 : index
    %34 = vector.load %arg1[%c387, %c0_20] : memref<392x128xf32, #tpu.memory_space<vmem>>, vector<1x128xf32>
    %cst_21 = arith.constant dense<0.000000e+00> : vector<128xf32>
    %35 = vector.multi_reduction <add>, %32, %cst_21 [0] : vector<8x128xf32> to vector<128xf32>
    %36 = vector.shape_cast %35 : vector<128xf32> to vector<1x128xf32>
    %cst_22 = arith.constant 8.000000e+00 : f32
    %37 = vector.broadcast %cst_22 : f32 to vector<1x128xf32>
    %38 = arith.divf %36, %37 : vector<1x128xf32>
    %39 = vector.broadcast %38 : vector<1x128xf32> to vector<8x128xf32>
    %40 = arith.subf %32, %39 : vector<8x128xf32>
    %41 = arith.mulf %40, %40 : vector<8x128xf32>
    %cst_23 = arith.constant dense<0.000000e+00> : vector<128xf32>
    %42 = vector.multi_reduction <add>, %41, %cst_23 [0] : vector<8x128xf32> to vector<128xf32>
    %43 = vector.shape_cast %42 : vector<128xf32> to vector<1x128xf32>
    %cst_24 = arith.constant 8.000000e+00 : f32
    %44 = vector.broadcast %cst_24 : f32 to vector<1x128xf32>
    %45 = arith.divf %43, %44 : vector<1x128xf32>
    %cst_25 = arith.constant 9.99999974E-6 : f32
    %46 = vector.broadcast %cst_25 : f32 to vector<1x128xf32>
    %47 = arith.addf %45, %46 : vector<1x128xf32>
    %48 = math.rsqrt %47 : vector<1x128xf32>
    %49 = arith.mulf %48, %33 : vector<1x128xf32>
    %50 = arith.mulf %38, %49 : vector<1x128xf32>
    %51 = arith.subf %34, %50 : vector<1x128xf32>
    %52 = vector.broadcast %49 : vector<1x128xf32> to vector<8x128xf32>
    %53 = arith.mulf %32, %52 : vector<8x128xf32>
    %54 = vector.broadcast %51 : vector<1x128xf32> to vector<8x128xf32>
    %55 = arith.addf %53, %54 : vector<8x128xf32>
    %56 = math.tanh %55 : vector<8x128xf32>
    %c256 = arith.constant 256 : index
    %c0_26 = arith.constant 0 : index
    %57 = vector.load %arg1[%c256, %c0_26] : memref<392x128xf32, #tpu.memory_space<vmem>>, vector<128x128xf32>
    %cst_27 = arith.constant dense<0.000000e+00> : vector<8x128xf32>
    %58 = tpu.matmul %56, %57, %cst_27 {dimension_numbers = #tpu.dot_dimension_numbers<[1], [0], [0], [1], [0, 0, 1, 1], [], []>} : vector<8x128xf32>, vector<128x128xf32>, vector<8x128xf32> -> vector<8x128xf32>
    %c388 = arith.constant 388 : index
    %c0_28 = arith.constant 0 : index
    %59 = vector.load %arg1[%c388, %c0_28] : memref<392x128xf32, #tpu.memory_space<vmem>>, vector<1x128xf32>
    %60 = vector.broadcast %59 : vector<1x128xf32> to vector<8x128xf32>
    %61 = arith.addf %58, %60 : vector<8x128xf32>
    %62 = vector.extract_strided_slice %61 {offsets = [0, 0], sizes = [8, 5], strides = [1, 1]} : vector<8x128xf32> to vector<8x5xf32>
    %c0_29 = arith.constant 0 : index
    %c0_30 = arith.constant 0 : index
    %63 = vector.load %arg2[%c0_29, %c0_30] : memref<8x5xf32, #tpu.memory_space<vmem>>, vector<8x5xf32>
    tpu.vector_store %arg2[%c0_29, %c0_30], %62 {strides = array<i32>} : memref<8x5xf32, #tpu.memory_space<vmem>>, vector<8x5xf32>,
    return
  }
}

</mosaic_0001>

<llo_original>
// kernel: multi_class_model_forward.1
$region0: #{multi_class_model_forward.1}
  #allocation0 [shape = 'u32[]', space=smem, size = 0x4, offset = 0x4, fixed_abs, tag = 'smem constant byte address 0x4 - core index']
  #allocation1 [shape = 'u32[144,128]{1,0:T(1,128)}', space=vmem, size = 0x12000, scoped, tag = 'internal scratch']
  #allocation2 [shape = 'f32[8,128]{1,0:T(8,128)}', space=vmem, size = 0x1000, scoped, tag = 'scratch operand']
  %s0 = inlined_call_operand.hbm [shape: f32[8,5], index: 0, kind: input, shape index: {}]
  %s1 = inlined_call_operand.hbm [shape: f32[392,128], index: 1, kind: input, shape index: {}]
  %s2 = inlined_call_operand.hbm [shape: f32[8,5], index: 2, kind: output, shape index: {}]
  %s3 = sld [smem:[#allocation0]]
  $region26: #{multi_class_model_forward.1} parent=0
    _
  %s5 = ssub.s32 1, %s3
  %s6 = scalar_select 0, %s5, %s3
  $region1: #{multi_class_model_forward.1} parent=0
    #allocation3 [shape = 'u8[4096]{0}', space=vmem, size = 0x1000, scoped, tag = 'input window, operand 0, single buffered']
    #allocation4 [shape = 's32[1]{0}', space=sflag, size = 0x4, scoped, tag = 'scoped memory for multi_class_model_forward.1']
    #allocation5 [shape = 's32[1]{0}', space=sflag, size = 0x4, scoped, tag = 'scoped memory for multi_class_model_forward.1']
    #allocation6 [shape = 'u8[200704]{0}', space=vmem, size = 0x31000, scoped, tag = 'input window, operand 1, single buffered']
    #allocation7 [shape = 's32[1]{0}', space=sflag, size = 0x4, scoped, tag = 'scoped memory for multi_class_model_forward.1']
    #allocation8 [shape = 'u8[4096]{0}', space=vmem, size = 0x1000, scoped, tag = 'output window, operand 0, single buffered']
    %7 = vsyncpa [#allocation4], 0
    %8 = vsyncpa [#allocation7], 0
    %9 = vsyncpa [#allocation5], 0
    // Predicated region
    $region2: #{multi_class_model_forward.1} parent=1 // pred_check
      _
    $region3: #{multi_class_model_forward.1} parent=1 // pred_check_branch
      %11 = sbr.rel (0) target = $region5
    $region4: #{multi_class_model_forward.1} parent=1 // pred_region
      %s13 = ssub.s32 128, 128
      %14 = vsyncadd [#allocation4], %s13
      %s16 = sshll.u32 [#allocation3], 4
      %s17 = int_to_ptr.vmem [resolvable:$true] %s16
      %19 = dma.hbm_to_vmem [thread:$0]  %s0, 128, %s17, [#allocation4]
    $region5: #{multi_class_model_forward.1} parent=1 // pred_fallthru
      _
    // Predicated region
    $region6: #{multi_class_model_forward.1} parent=1 // pred_check
      _
    $region7: #{multi_class_model_forward.1} parent=1 // pred_check_branch
      %21 = sbr.rel (0) target = $region9
    $region8: #{multi_class_model_forward.1} parent=1 // pred_region
      %s23 = ssub.s32 6272, 6272
      %24 = vsyncadd [#allocation7], %s23
      %s25 = sshll.u32 [#allocation6], 4
      %s26 = int_to_ptr.vmem [resolvable:$true] %s25
      %31 = dma.hbm_to_vmem [thread:$0]  %s1, 6272, %s26, [#allocation7], 128, 128, 8
    $region9: #{multi_class_model_forward.1} parent=1 // pred_fallthru
      _
    // Predicated region
    $region10: #{multi_class_model_forward.1} parent=1 // pred_check
      _
    $region11: #{multi_class_model_forward.1} parent=1 // pred_check_branch
      %33 = sbr.rel (0) target = $region13
    $region12: #{multi_class_model_forward.1} parent=1 // pred_region
      %34 = dma.done [#allocation4], 128
    $region13: #{multi_class_model_forward.1} parent=1 // pred_fallthru
      _
    // Predicated region
    $region14: #{multi_class_model_forward.1} parent=1 // pred_check
      _
    $region15: #{multi_class_model_forward.1} parent=1 // pred_check_branch
      %36 = sbr.rel (0) target = $region17
    $region16: #{multi_class_model_forward.1} parent=1 // pred_region
      %37 = dma.done [#allocation7], 6272
    $region17: #{multi_class_model_forward.1} parent=1 // pred_fallthru
      _
    %38 = vst [vmem:[#allocation2] sm:$0xff] 0.0
    %v39 = vld [vmem:[#allocation3] sm:$0xff]
    %vm40 = vcmask 39936
    %41 = vst.msk [vmem:[#allocation2] sm:$0xff] %vm40, %v39
    %v42 = vld [vmem:[#allocation2] sm:$0xff]
    %v43 = vld [vmem:[#allocation6] sm:$0xff]
    %v44 = vld [vmem:[#allocation6 + $0x8] sm:$0xff]
    %v45 = vld [vmem:[#allocation6 + $0x10] sm:$0xff]
    %v46 = vld [vmem:[#allocation6 + $0x18] sm:$0xff]
    %v47 = vld [vmem:[#allocation6 + $0x20] sm:$0xff]
    %v48 = vld [vmem:[#allocation6 + $0x28] sm:$0xff]
    %v49 = vld [vmem:[#allocation6 + $0x30] sm:$0xff]
    %v50 = vld [vmem:[#allocation6 + $0x38] sm:$0xff]
    %v51 = vld [vmem:[#allocation6 + $0x40] sm:$0xff]
    %v52 = vld [vmem:[#allocation6 + $0x48] sm:$0xff]
    %v53 = vld [vmem:[#allocation6 + $0x50] sm:$0xff]
    %v54 = vld [vmem:[#allocation6 + $0x58] sm:$0xff]
    %v55 = vld [vmem:[#allocation6 + $0x60] sm:$0xff]
    %v56 = vld [vmem:[#allocation6 + $0x68] sm:$0xff]
    %v57 = vld [vmem:[#allocation6 + $0x70] sm:$0xff]
    %v58 = vld [vmem:[#allocation6 + $0x78] sm:$0xff]
    %59 = vmatprep.subr.mxu0 0.0
    %60 = vmatpush1.msra.mxu0 %v43
    %61 = vmatprep.subr.mxu0 0.0
    %62 = vmatpush1.msra.mxu0 %v44
    %63 = vmatprep.subr.mxu0 0.0
    %64 = vmatpush1.msra.mxu0 %v45
    %65 = vmatprep.subr.mxu0 0.0
    %66 = vmatpush1.msra.mxu0 %v46
    %67 = vmatprep.subr.mxu0 0.0
    %68 = vmatpush1.msra.mxu0 %v47
    %69 = vmatprep.subr.mxu0 0.0
    %70 = vmatpush1.msra.mxu0 %v48
    %71 = vmatprep.subr.mxu0 0.0
    %72 = vmatpush1.msra.mxu0 %v49
    %73 = vmatprep.subr.mxu0 0.0
    %74 = vmatpush1.msra.mxu0 %v50
    %75 = vmatprep.subr.mxu0 0.0
    %76 = vmatpush1.msra.mxu0 %v51
    %77 = vmatprep.subr.mxu0 0.0
    %78 = vmatpush1.msra.mxu0 %v52
    %79 = vmatprep.subr.mxu0 0.0
    %80 = vmatpush1.msra.mxu0 %v53
    %81 = vmatprep.subr.mxu0 0.0
    %82 = vmatpush1.msra.mxu0 %v54
    %83 = vmatprep.subr.mxu0 0.0
    %84 = vmatpush1.msra.mxu0 %v55
    %85 = vmatprep.subr.mxu0 0.0
    %86 = vmatpush1.msra.mxu0 %v56
    %87 = vmatprep.subr.mxu0 0.0
    %88 = vmatpush1.msra.mxu0 %v57
    %89 = vmatprep.subr.mxu0 0.0
    %90 = vmatpush1.msra.mxu0 %v58
    %91 = vmatprep.subr.mxu0 0.0
    %92 = vmatpush1.msra.mxu0 0.0
    %93 = vmatprep.subr.mxu0 0.0
    %94 = vmatpush1.msra.mxu0 0.0
    %95 = vmatprep.subr.mxu0 0.0
    %96 = vmatpush1.msra.mxu0 0.0
    %97 = vmatprep.subr.mxu0 0.0
    %98 = vmatpush1.msra.mxu0 0.0
    %99 = vmatprep.subr.mxu0 0.0
    %100 = vmatpush1.msra.mxu0 0.0
    %101 = vmatprep.subr.mxu0 0.0
    %102 = vmatpush1.msra.mxu0 0.0
    %103 = vmatprep.subr.mxu0 0.0
    %104 = vmatpush1.msra.mxu0 0.0
    %105 = vmatprep.subr.mxu0 0.0
    %106 = vmatpush1.msra.mxu0 0.0
    %107 = vmatprep.subr.mxu0 0.0
    %108 = vmatpush1.msra.mxu0 0.0
    %109 = vmatprep.subr.mxu0 0.0
    %110 = vmatpush1.msra.mxu0 0.0
    %111 = vmatprep.subr.mxu0 0.0
    %112 = vmatpush1.msra.mxu0 0.0
    %113 = vmatprep.subr.mxu0 0.0
    %114 = vmatpush1.msra.mxu0 0.0
    %115 = vmatprep.subr.mxu0 0.0
    %116 = vmatpush1.msra.mxu0 0.0
    %117 = vmatprep.subr.mxu0 0.0
    %118 = vmatpush1.msra.mxu0 0.0
    %119 = vmatprep.subr.mxu0 0.0
    %120 = vmatpush1.msra.mxu0 0.0
    %121 = vmatprep.subr.mxu0 0.0
    %122 = vmatpush1.msra.mxu0 0.0
    %123 = vmatprep.mubr.f32.mxu0 0.0
    %124 = vmatmul.mubr.f32.gmra.mrb[0].mxu0 %v42
    %v125 = vpop.f32.mrb[0].mxu0
    %v126 = vadd.f32 0.0, %v125
    %v127 = vpop.f32.mrb[0].mxu0
    %128 = vdwg.mxu0
    %v129 = vld [vmem:[#allocation6 + $0x180] sm:$0x1]
    %v130 = vld [vmem:[#allocation6 + $0x181] sm:$0x1]
    %v131 = vrot.slane %v126, 4
    %v132 = vadd.f32 %v126, %v131
    %v133 = vrot.slane %v132, 2
    %v134 = vadd.f32 %v132, %v133
    %v135 = vrot.slane %v134, 1
    %v136 = vadd.f32 %v134, %v135
    %v137 = vrcp.pop 8.0
    %v138 = vmul.f32 %v136, %v137
    %v139 = vsub.f32 %v126, %v138
    %v140 = vmul.f32 %v139, %v139
    %v141 = vrot.slane %v140, 4
    %v142 = vadd.f32 %v140, %v141
    %v143 = vrot.slane %v142, 2
    %v144 = vadd.f32 %v142, %v143
    %v145 = vrot.slane %v144, 1
    %v146 = vadd.f32 %v144, %v145
    %v147 = vmul.f32 %v146, %v137
    %v148 = vadd.f32 %v147, 1e-05
    %v149 = vrsqrt.pop %v148
    %v150 = vmul.f32 %v149, %v129
    %v151 = vmul.f32 %v138, %v150
    %v152 = vsub.f32 %v130, %v151
    %v153 = vlaneseq
    %v154 = vshrl.u32 %v153, 7
    %v155 = vsub.s32 0, %v154
    %v156 = vrot.slane %v150, %v155
    %v157 = vmul.f32 %v126, %v156
    %v158 = vlaneseq
    %v159 = vshrl.u32 %v158, 7
    %v160 = vsub.s32 0, %v159
    %v161 = vrot.slane %v152, %v160
    %v162 = vadd.f32 %v157, %v161
    %v163 = vtanh.pop %v162
    %v164 = vld [vmem:[#allocation6 + $0x80] sm:$0xff]
    %v165 = vld [vmem:[#allocation6 + $0x88] sm:$0xff]
    %v166 = vld [vmem:[#allocation6 + $0x90] sm:$0xff]
    %v167 = vld [vmem:[#allocation6 + $0x98] sm:$0xff]
    %v168 = vld [vmem:[#allocation6 + $0xa0] sm:$0xff]
    %v169 = vld [vmem:[#allocation6 + $0xa8] sm:$0xff]
    %v170 = vld [vmem:[#allocation6 + $0xb0] sm:$0xff]
    %v171 = vld [vmem:[#allocation6 + $0xb8] sm:$0xff]
    %v172 = vld [vmem:[#allocation6 + $0xc0] sm:$0xff]
    %v173 = vld [vmem:[#allocation6 + $0xc8] sm:$0xff]
    %v174 = vld [vmem:[#allocation6 + $0xd0] sm:$0xff]
    %v175 = vld [vmem:[#allocation6 + $0xd8] sm:$0xff]
    %v176 = vld [vmem:[#allocation6 + $0xe0] sm:$0xff]
    %v177 = vld [vmem:[#allocation6 + $0xe8] sm:$0xff]
    %v178 = vld [vmem:[#allocation6 + $0xf0] sm:$0xff]
    %v179 = vld [vmem:[#allocation6 + $0xf8] sm:$0xff]
    %180 = vmatprep.subr.mxu0 0.0
    %181 = vmatpush1.msra.mxu0 %v164
    %182 = vmatprep.subr.mxu0 0.0
    %183 = vmatpush1.msra.mxu0 %v165
    %184 = vmatprep.subr.mxu0 0.0
    %185 = vmatpush1.msra.mxu0 %v166
    %186 = vmatprep.subr.mxu0 0.0
    %187 = vmatpush1.msra.mxu0 %v167
    %188 = vmatprep.subr.mxu0 0.0
    %189 = vmatpush1.msra.mxu0 %v168
    %190 = vmatprep.subr.mxu0 0.0
    %191 = vmatpush1.msra.mxu0 %v169
    %192 = vmatprep.subr.mxu0 0.0
    %193 = vmatpush1.msra.mxu0 %v170
    %194 = vmatprep.subr.mxu0 0.0
    %195 = vmatpush1.msra.mxu0 %v171
    %196 = vmatprep.subr.mxu0 0.0
    %197 = vmatpush1.msra.mxu0 %v172
    %198 = vmatprep.subr.mxu0 0.0
    %199 = vmatpush1.msra.mxu0 %v173
    %200 = vmatprep.subr.mxu0 0.0
    %201 = vmatpush1.msra.mxu0 %v174
    %202 = vmatprep.subr.mxu0 0.0
    %203 = vmatpush1.msra.mxu0 %v175
    %204 = vmatprep.subr.mxu0 0.0
    %205 = vmatpush1.msra.mxu0 %v176
    %206 = vmatprep.subr.mxu0 0.0
    %207 = vmatpush1.msra.mxu0 %v177
    %208 = vmatprep.subr.mxu0 0.0
    %209 = vmatpush1.msra.mxu0 %v178
    %210 = vmatprep.subr.mxu0 0.0
    %211 = vmatpush1.msra.mxu0 %v179
    %212 = vmatprep.subr.mxu0 0.0
    %213 = vmatpush1.msra.mxu0 0.0
    %214 = vmatprep.subr.mxu0 0.0
    %215 = vmatpush1.msra.mxu0 0.0
    %216 = vmatprep.subr.mxu0 0.0
    %217 = vmatpush1.msra.mxu0 0.0
    %218 = vmatprep.subr.mxu0 0.0
    %219 = vmatpush1.msra.mxu0 0.0
    %220 = vmatprep.subr.mxu0 0.0
    %221 = vmatpush1.msra.mxu0 0.0
    %222 = vmatprep.subr.mxu0 0.0
    %223 = vmatpush1.msra.mxu0 0.0
    %224 = vmatprep.subr.mxu0 0.0
    %225 = vmatpush1.msra.mxu0 0.0
    %226 = vmatprep.subr.mxu0 0.0
    %227 = vmatpush1.msra.mxu0 0.0
    %228 = vmatprep.subr.mxu0 0.0
    %229 = vmatpush1.msra.mxu0 0.0
    %230 = vmatprep.subr.mxu0 0.0
    %231 = vmatpush1.msra.mxu0 0.0
    %232 = vmatprep.subr.mxu0 0.0
    %233 = vmatpush1.msra.mxu0 0.0
    %234 = vmatprep.subr.mxu0 0.0
    %235 = vmatpush1.msra.mxu0 0.0
    %236 = vmatprep.subr.mxu0 0.0
    %237 = vmatpush1.msra.mxu0 0.0
    %238 = vmatprep.subr.mxu0 0.0
    %239 = vmatpush1.msra.mxu0 0.0
    %240 = vmatprep.subr.mxu0 0.0
    %241 = vmatpush1.msra.mxu0 0.0
    %242 = vmatprep.subr.mxu0 0.0
    %243 = vmatpush1.msra.mxu0 0.0
    %244 = vmatprep.mubr.f32.mxu0 0.0
    %245 = vmatmul.mubr.f32.gmra.mrb[0].mxu0 %v163
    %v246 = vpop.f32.mrb[0].mxu0
    %v247 = vadd.f32 0.0, %v246
    %v248 = vpop.f32.mrb[0].mxu0
    %249 = vdwg.mxu0
    %v250 = vld [vmem:[#allocation6 + $0x182] sm:$0x1]
    %v251 = vld [vmem:[#allocation6 + $0x183] sm:$0x1]
    %v252 = vrot.slane %v247, 4
    %v253 = vadd.f32 %v247, %v252
    %v254 = vrot.slane %v253, 2
    %v255 = vadd.f32 %v253, %v254
    %v256 = vrot.slane %v255, 1
    %v257 = vadd.f32 %v255, %v256
    %v258 = vmul.f32 %v257, %v137
    %v259 = vsub.f32 %v247, %v258
    %v260 = vmul.f32 %v259, %v259
    %v261 = vrot.slane %v260, 4
    %v262 = vadd.f32 %v260, %v261
    %v263 = vrot.slane %v262, 2
    %v264 = vadd.f32 %v262, %v263
    %v265 = vrot.slane %v264, 1
    %v266 = vadd.f32 %v264, %v265
    %v267 = vmul.f32 %v266, %v137
    %v268 = vadd.f32 %v267, 1e-05
    %v269 = vrsqrt.pop %v268
    %v270 = vmul.f32 %v269, %v250
    %v271 = vmul.f32 %v258, %v270
    %v272 = vsub.f32 %v251, %v271
    %v273 = vlaneseq
    %v274 = vshrl.u32 %v273, 7
    %v275 = vsub.s32 0, %v274
    %v276 = vrot.slane %v270, %v275
    %v277 = vmul.f32 %v247, %v276
    %v278 = vlaneseq
    %v279 = vshrl.u32 %v278, 7
    %v280 = vsub.s32 0, %v279
    %v281 = vrot.slane %v272, %v280
    %v282 = vadd.f32 %v277, %v281
    %v283 = vtanh.pop %v282
    %v284 = vld [vmem:[#allocation6 + $0x100] sm:$0xff]
    %v285 = vld [vmem:[#allocation6 + $0x108] sm:$0xff]
    %v286 = vld [vmem:[#allocation6 + $0x110] sm:$0xff]
    %v287 = vld [vmem:[#allocation6 + $0x118] sm:$0xff]
    %v288 = vld [vmem:[#allocation6 + $0x120] sm:$0xff]
    %v289 = vld [vmem:[#allocation6 + $0x128] sm:$0xff]
    %v290 = vld [vmem:[#allocation6 + $0x130] sm:$0xff]
    %v291 = vld [vmem:[#allocation6 + $0x138] sm:$0xff]
    %v292 = vld [vmem:[#allocation6 + $0x140] sm:$0xff]
    %v293 = vld [vmem:[#allocation6 + $0x148] sm:$0xff]
    %v294 = vld [vmem:[#allocation6 + $0x150] sm:$0xff]
    %v295 = vld [vmem:[#allocation6 + $0x158] sm:$0xff]
    %v296 = vld [vmem:[#allocation6 + $0x160] sm:$0xff]
    %v297 = vld [vmem:[#allocation6 + $0x168] sm:$0xff]
    %v298 = vld [vmem:[#allocation6 + $0x170] sm:$0xff]
    %v299 = vld [vmem:[#allocation6 + $0x178] sm:$0xff]
    %v300 = vld [vmem:[#allocation6 + $0x184] sm:$0x1]
    %v301 = vlaneseq
    %v302 = vshrl.u32 %v301, 7
    %v303 = vsub.s32 0, %v302
    %v304 = vrot.slane %v300, %v303
    %305 = vmatprep.subr.mxu0 0.0
    %306 = vmatpush1.msra.mxu0 %v284
    %307 = vmatprep.subr.mxu0 0.0
    %308 = vmatpush1.msra.mxu0 %v285
    %309 = vmatprep.subr.mxu0 0.0
    %310 = vmatpush1.msra.mxu0 %v286
    %311 = vmatprep.subr.mxu0 0.0
    %312 = vmatpush1.msra.mxu0 %v287
    %313 = vmatprep.subr.mxu0 0.0
    %314 = vmatpush1.msra.mxu0 %v288
    %315 = vmatprep.subr.mxu0 0.0
    %316 = vmatpush1.msra.mxu0 %v289
    %317 = vmatprep.subr.mxu0 0.0
    %318 = vmatpush1.msra.mxu0 %v290
    %319 = vmatprep.subr.mxu0 0.0
    %320 = vmatpush1.msra.mxu0 %v291
    %321 = vmatprep.subr.mxu0 0.0
    %322 = vmatpush1.msra.mxu0 %v292
    %323 = vmatprep.subr.mxu0 0.0
    %324 = vmatpush1.msra.mxu0 %v293
    %325 = vmatprep.subr.mxu0 0.0
    %326 = vmatpush1.msra.mxu0 %v294
    %327 = vmatprep.subr.mxu0 0.0
    %328 = vmatpush1.msra.mxu0 %v295
    %329 = vmatprep.subr.mxu0 0.0
    %330 = vmatpush1.msra.mxu0 %v296
    %331 = vmatprep.subr.mxu0 0.0
    %332 = vmatpush1.msra.mxu0 %v297
    %333 = vmatprep.subr.mxu0 0.0
    %334 = vmatpush1.msra.mxu0 %v298
    %335 = vmatprep.subr.mxu0 0.0
    %336 = vmatpush1.msra.mxu0 %v299
    %337 = vmatprep.subr.mxu0 0.0
    %338 = vmatpush1.msra.mxu0 0.0
    %339 = vmatprep.subr.mxu0 0.0
    %340 = vmatpush1.msra.mxu0 0.0
    %341 = vmatprep.subr.mxu0 0.0
    %342 = vmatpush1.msra.mxu0 0.0
    %343 = vmatprep.subr.mxu0 0.0
    %344 = vmatpush1.msra.mxu0 0.0
    %345 = vmatprep.subr.mxu0 0.0
    %346 = vmatpush1.msra.mxu0 0.0
    %347 = vmatprep.subr.mxu0 0.0
    %348 = vmatpush1.msra.mxu0 0.0
    %349 = vmatprep.subr.mxu0 0.0
    %350 = vmatpush1.msra.mxu0 0.0
    %351 = vmatprep.subr.mxu0 0.0
    %352 = vmatpush1.msra.mxu0 0.0
    %353 = vmatprep.subr.mxu0 0.0
    %354 = vmatpush1.msra.mxu0 0.0
    %355 = vmatprep.subr.mxu0 0.0
    %356 = vmatpush1.msra.mxu0 0.0
    %357 = vmatprep.subr.mxu0 0.0
    %358 = vmatpush1.msra.mxu0 0.0
    %359 = vmatprep.subr.mxu0 0.0
    %360 = vmatpush1.msra.mxu0 0.0
    %361 = vmatprep.subr.mxu0 0.0
    %362 = vmatpush1.msra.mxu0 0.0
    %363 = vmatprep.subr.mxu0 0.0
    %364 = vmatpush1.msra.mxu0 0.0
    %365 = vmatprep.subr.mxu0 0.0
    %366 = vmatpush1.msra.mxu0 0.0
    %367 = vmatprep.subr.mxu0 0.0
    %368 = vmatpush1.msra.mxu0 0.0
    %369 = vmatprep.mubr.f32.mxu0 0.0
    %370 = vmatmul.mubr.f32.gmra.mrb[0].mxu0 %v283
    %v371 = vpop.f32.mrb[0].mxu0
    %v372 = vadd.f32 %v304, %v371
    %v373 = vpop.f32.mrb[0].mxu0
    %374 = vdwg.mxu0
    %375 = vst.msk [vmem:[#allocation8] sm:$0xff] %vm40, %v372
    // Predicated region
    $region18: #{multi_class_model_forward.1} parent=1 // pred_check
      _
    $region19: #{multi_class_model_forward.1} parent=1 // pred_check_branch
      %377 = sbr.rel (0) target = $region21
    $region20: #{multi_class_model_forward.1} parent=1 // pred_region
      %s379 = ssub.s32 128, 128
      %380 = vsyncadd [#allocation5], %s379
      %s382 = sshll.u32 [#allocation8], 4
      %s383 = int_to_ptr.vmem [resolvable:$true] %s382
      %385 = dma.vmem_to_hbm [thread:$0]  %s383, 128, %s2, [#allocation5]
    $region21: #{multi_class_model_forward.1} parent=1 // pred_fallthru
      _
    // Predicated region
    $region22: #{multi_class_model_forward.1} parent=1 // pred_check
      _
    $region23: #{multi_class_model_forward.1} parent=1 // pred_check_branch
      %387 = sbr.rel (0) target = $region25
    $region24: #{multi_class_model_forward.1} parent=1 // pred_region
      %388 = dma.done [#allocation5], 128
    $region25: #{multi_class_model_forward.1} parent=1 // pred_fallthru
      _
    %389 = vsyncpa [#allocation4], 1
    %390 = vsyncpa [#allocation7], 1
    %391 = vsyncpa [#allocation5], 1

</llo_original>
